<compile_context>
chip_gen: v5e
topology: v5e:2x2
jax: 0.10.0
libtpu: 0.0.40
codegen_flags: <defaults>
</compile_context>

<pallas_src>
import functools

import jax
import jax.numpy as jnp
from jax.experimental import pallas as pl
from jax.experimental.pallas import tpu as pltpu

_MAX_TILE_ROWS = 2048   # (2048, 512) f32 = 4 MiB block per input
_PAD_LOGIT = -1e9       # BCE-with-logits of (x=-1e9, t=0) is exactly 0


def _cdiv(a, b):
    return -(-a // b)


def _round_up(a, b):
    return _cdiv(a, b) * b


def _focal_loss_kernel(x_ref, t_ref, out_ref, acc_ref, *,
                       gamma, rows_valid, needs_row_mask):
    j = pl.program_id(1)

    @pl.when(j == 0)
    def _():
        acc_ref[...] = jnp.zeros_like(acc_ref)

    x = x_ref[...].astype(jnp.float32)
    t = t_ref[...].astype(jnp.float32)

    # Numerically-stable binary_cross_entropy_with_logits (reduction='none'):
    #   CE = max(x, 0) - x*t + log(1 + exp(-|x|))
    ce = jnp.maximum(x, 0.0) - x * t + jnp.log1p(jnp.exp(-jnp.abs(x)))
    pt = jnp.exp(-ce)

    if gamma == 0.0:
        loss = ce                                    # plain BCE
    else:
        w = 1.0 - pt
        if float(gamma).is_integer() and 1.0 <= gamma <= 8.0:
            # Integer gamma (e.g. the common gamma=2): explicit VPU multiplies,
            # avoids pow's exp+log on the single EUP slot.
            focal = w
            for _ in range(int(gamma) - 1):
                focal = focal * w
        else:
            focal = w ** gamma
        loss = ce * focal

    rows, lanes = loss.shape

    if needs_row_mask:
        # Only the boundary row-block is partial: zero rows past the real data.
        base_row = (pl.program_id(0) * pl.num_programs(1) + j) * rows
        r_idx = jax.lax.broadcasted_iota(jnp.int32, (rows, lanes), 0)
        loss = jnp.where(base_row + r_idx < rows_valid, loss, 0.0)

    # VPU-only partial accumulation into the resident (8, lanes) VMEM buffer
    # (the sublane-splitting reshape is a free vreg reinterpretation).
    acc_ref[...] += loss.reshape(rows // 8, 8, lanes).sum(axis=0)

    @pl.when(j == pl.num_programs(1) - 1)
    def _():
        # Single cross-lane/sublane reduction per core, done once at the end.
        out_ref[0, 0] = jnp.sum(acc_ref[...])


def focal_loss(logits, targets, gamma: float = 0.0,
               max_tile_rows: int = _MAX_TILE_ROWS):
    """Focal loss (mean-reduced) matching the PyTorch FocalLoss module.

    Accepts f32 or bf16 inputs of any shape (math is done in f32 in-kernel).
    """
    assert logits.shape == targets.shape
    assert max_tile_rows % 16 == 0 and max_tile_rows >= 16
    n = int(logits.size)
    assert n > 0, "focal_loss: empty input"

    x = logits.reshape(-1)
    t = targets.reshape(-1)

    # Pick a lane-dense slab width that divides the flat length so the 2-D
    # reshape is free (no HBM copy).  Only ragged / tiny inputs get a small
    # padded copy; padded elements use _PAD_LOGIT so their loss is exactly 0.
    width = None
    n_flat = n
    for w in (512, 256, 128):
        if n % w == 0 and n // w >= 16:
            width = w
            break
    if width is None:
        width = 128
        n_flat = max(_round_up(n, width), 16 * width)

    pad = n_flat - n
    if pad:
        x = jnp.concatenate([x, jnp.full((pad,), _PAD_LOGIT, x.dtype)])
        t = jnp.concatenate([t, jnp.zeros((pad,), t.dtype)])

    rows = n_flat // width
    x2 = x.reshape(rows, width)
    t2 = t.reshape(rows, width)

    # Row tiling: multiple of 16 (bf16-safe) and never larger than the array,
    # so only the last block may be partial (handled by the in-kernel mask).
    tile_rows = min(max_tile_rows, (rows // 16) * 16)
    row_blocks = _cdiv(rows, tile_rows)
    if row_blocks > 1 and row_blocks % 2 == 1:
        # Rebalance so the two cores get equal work (avoid a fully-empty block).
        target_blocks = row_blocks + 1
        tile_rows = max(16, min(tile_rows,
                                _round_up(_cdiv(rows, target_blocks), 16)))
        row_blocks = _cdiv(rows, tile_rows)

    ncores = 2 if row_blocks >= 2 else 1     # megacore split on v7x
    inner = _cdiv(row_blocks, ncores)
    coverage = ncores * inner * tile_rows
    needs_row_mask = coverage != rows

    kernel = functools.partial(
        _focal_loss_kernel, gamma=float(gamma), rows_valid=rows,
        needs_row_mask=needs_row_mask)

    in_map = lambda c, j: (c * inner + j, 0)
    partials = pl.pallas_call(
        kernel,
        out_shape=jax.ShapeDtypeStruct((ncores, 1), jnp.float32),
        grid_spec=pltpu.PrefetchScalarGridSpec(
            num_scalar_prefetch=0,
            grid=(ncores, inner),
            in_specs=[
                pl.BlockSpec((tile_rows, width), in_map),
                pl.BlockSpec((tile_rows, width), in_map),
            ],
            out_specs=pl.BlockSpec(
                (1, 1), lambda c, j: (c, 0),
                memory_space=pltpu.MemorySpace.SMEM),
            scratch_shapes=[pltpu.VMEM((8, width), jnp.float32)],
        ),
        compiler_params=pltpu.CompilerParams(
            dimension_semantics=("parallel", "arbitrary"),
            vmem_limit_bytes=40 * 1024 * 1024),
    )(x2, t2)

    return jnp.sum(partials) / jnp.float32(n)


def focal_loss_ref(logits, targets, gamma: float = 0.0):
    """Pure-JAX reference (mirrors the PyTorch module)."""
    x = logits.astype(jnp.float32)
    t = targets.astype(jnp.float32)
    ce = jnp.maximum(x, 0.0) - x * t + jnp.log1p(jnp.exp(-jnp.abs(x)))
    pt = jnp.exp(-ce)
    return jnp.mean(ce * (1.0 - pt) ** gamma)


if __name__ == "__main__":
    key = jax.random.PRNGKey(0)
    ks = jax.random.split(key, 12)

    def check(shape, gamma, k1, k2, dtype=jnp.float32, rtol=2e-5, **kw):
        logits = (jax.random.normal(k1, shape, dtype=jnp.float32) * 2.0).astype(dtype)
        targets = (jax.random.uniform(k2, shape) > 0.6).astype(dtype)
        out = jax.block_until_ready(focal_loss(logits, targets, gamma=gamma, **kw))
        ref = focal_loss_ref(logits, targets, gamma=gamma)
        assert jnp.allclose(out, ref, rtol=rtol, atol=1e-6), (shape, gamma, out, ref)

    # Aligned (batch, num_classes) input, gamma=2 (the common focal setting).
    check((16, 128), 2.0, ks[0], ks[1])
    # gamma = 0 -> plain BCE path (no focal factor at all).
    check((16, 128), 0.0, ks[0], ks[1])
    # Ragged tiny input -> padded slab + pad-value path.
    check((7, 13), 2.0, ks[2], ks[3])
    # Partial final row-block + two-core grid -> in-kernel row-mask path.
    check((17, 384), 2.0, ks[4], ks[5])
    # Larger aligned input, fractional gamma -> pow path.
    check((256, 512), 1.5, ks[6], ks[7])
    # Multi-step accumulation across the inner grid axis (small tile override).
    check((530, 128), 2.0, ks[8], ks[9], max_tile_rows=64)
    # bf16 inputs (16-row sublane packing path).
    check((16, 128), 2.0, ks[10], ks[11], dtype=jnp.bfloat16, rtol=1e-4)

    print("KERNEL_OK")
</pallas_src>

<mosaic_0001>
module attributes {stable_mosaic.version = 11 : i64} {
  func.func @_focal_loss_kernel(%arg0: i32, %arg1: i32, %arg2: memref<16x128xf32, #tpu.memory_space<vmem>>, %arg3: memref<16x128xf32, #tpu.memory_space<vmem>>, %arg4: memref<1x1xf32, #tpu.memory_space<smem>>, %arg5: memref<8x128xf32, #tpu.memory_space<vmem>>) attributes {dimension_semantics = [#tpu.dimension_semantics<parallel>, #tpu.dimension_semantics<arbitrary>], iteration_bounds = array<i64: 1, 1>, scalar_prefetch = 0 : i64, scratch_operands = 1 : i64, tpu.core_type = #tpu.core_type<tc>, window_params = [{transform_indices = @transform_0, window_bounds = array<i64: 16, 128>}, {transform_indices = @transform_1, window_bounds = array<i64: 16, 128>}, {transform_indices = @transform_2, window_bounds = array<i64: 1, 1>}]} {
    %c0_i32 = arith.constant 0 : i32
    %0 = arith.cmpi eq, %arg1, %c0_i32 : i32
    %1 = arith.extui %0 : i1 to i32
    %c0_i32_0 = arith.constant 0 : i32
    %2 = arith.cmpi ne, %1, %c0_i32_0 : i32
    scf.if %2 {
      %cst_14 = arith.constant 0.000000e+00 : f32
      %30 = vector.broadcast %cst_14 : f32 to vector<8x128xf32>
      %c0_15 = arith.constant 0 : index
      %c0_16 = arith.constant 0 : index
      %31 = vector.load %arg5[%c0_15, %c0_16] : memref<8x128xf32, #tpu.memory_space<vmem>>, vector<8x128xf32>
      tpu.vector_store %arg5[%c0_15, %c0_16], %30 {strides = array<i32>} : memref<8x128xf32, #tpu.memory_space<vmem>>, vector<8x128xf32>,
    } else {
    }
    %c0 = arith.constant 0 : index
    %c0_1 = arith.constant 0 : index
    %3 = vector.load %arg2[%c0, %c0_1] : memref<16x128xf32, #tpu.memory_space<vmem>>, vector<16x128xf32>
    %c0_2 = arith.constant 0 : index
    %c0_3 = arith.constant 0 : index
    %4 = vector.load %arg3[%c0_2, %c0_3] : memref<16x128xf32, #tpu.memory_space<vmem>>, vector<16x128xf32>
    %cst = arith.constant 0.000000e+00 : f32
    %5 = vector.broadcast %cst : f32 to vector<16x128xf32>
    %6 = arith.maximumf %3, %5 : vector<16x128xf32>
    %7 = arith.mulf %3, %4 : vector<16x128xf32>
    %8 = arith.subf %6, %7 : vector<16x128xf32>
    %9 = math.absf %3 : vector<16x128xf32>
    %cst_4 = arith.constant 0.000000e+00 : f32
    %10 = vector.broadcast %cst_4 : f32 to vector<16x128xf32>
    %11 = arith.subf %10, %9 : vector<16x128xf32>
    %12 = math.exp %11 : vector<16x128xf32>
    %13 = math.log1p %12 : vector<16x128xf32>
    %14 = arith.addf %8, %13 : vector<16x128xf32>
    %cst_5 = arith.constant 0.000000e+00 : f32
    %15 = vector.broadcast %cst_5 : f32 to vector<16x128xf32>
    %16 = arith.subf %15, %14 : vector<16x128xf32>
    %17 = math.exp %16 : vector<16x128xf32>
    %cst_6 = arith.constant 1.000000e+00 : f32
    %18 = vector.broadcast %cst_6 : f32 to vector<16x128xf32>
    %19 = arith.subf %18, %17 : vector<16x128xf32>
    %20 = arith.mulf %19, %19 : vector<16x128xf32>
    %21 = arith.mulf %14, %20 : vector<16x128xf32>
    %c0_7 = arith.constant 0 : index
    %c0_8 = arith.constant 0 : index
    %22 = vector.load %arg5[%c0_7, %c0_8] : memref<8x128xf32, #tpu.memory_space<vmem>>, vector<8x128xf32>
    %23 = vector.shape_cast %21 : vector<16x128xf32> to vector<2x8x128xf32>
    %cst_9 = arith.constant dense<0.000000e+00> : vector<8x128xf32>
    %24 = vector.multi_reduction <add>, %23, %cst_9 [0] : vector<2x8x128xf32> to vector<8x128xf32>
    %25 = arith.addf %22, %24 : vector<8x128xf32>
    %c0_10 = arith.constant 0 : index
    %c0_11 = arith.constant 0 : index
    %26 = vector.load %arg5[%c0_10, %c0_11] : memref<8x128xf32, #tpu.memory_space<vmem>>, vector<8x128xf32>
    tpu.vector_store %arg5[%c0_10, %c0_11], %25 {strides = array<i32>} : memref<8x128xf32, #tpu.memory_space<vmem>>, vector<8x128xf32>,
    %c0_i32_12 = arith.constant 0 : i32
    %27 = arith.cmpi eq, %arg1, %c0_i32_12 : i32
    %28 = arith.extui %27 : i1 to i32
    %c0_i32_13 = arith.constant 0 : i32
    %29 = arith.cmpi ne, %28, %c0_i32_13 : i32
    scf.if %29 {
      %c0_14 = arith.constant 0 : index
      %c0_15 = arith.constant 0 : index
      %30 = vector.load %arg5[%c0_14, %c0_15] : memref<8x128xf32, #tpu.memory_space<vmem>>, vector<8x128xf32>
      %31 = vector.shape_cast %30 : vector<8x128xf32> to vector<1x8x128xf32>
      %cst_16 = arith.constant dense<0.000000e+00> : vector<1xf32>
      %32 = vector.multi_reduction <add>, %31, %cst_16 [1, 2] : vector<1x8x128xf32> to vector<1xf32>
      %33 = vector.shape_cast %32 : vector<1xf32> to vector<1x1x1xf32>
      %34 = vector.extract %33[0, 0, 0] : f32 from vector<1x1x1xf32>
      %c0_17 = arith.constant 0 : index
      %c0_18 = arith.constant 0 : index
      %35 = memref.load %arg4[%c0_17, %c0_18] : memref<1x1xf32, #tpu.memory_space<smem>>
      memref.store %34, %arg4[%c0_17, %c0_18] : memref<1x1xf32, #tpu.memory_space<smem>>
    } else {
    }
    return
  }
  func.func @transform_0(%arg0: i32, %arg1: i32) -> (i32, i32) {
    %c1_i32 = arith.constant 1 : i32
    %0 = arith.muli %arg0, %c1_i32 : i32
    %1 = arith.addi %0, %arg1 : i32
    %c0_i32 = arith.constant 0 : i32
    %c0_i32_0 = arith.constant 0 : i32
    return %1, %c0_i32 : i32, i32
  }
  func.func @transform_1(%arg0: i32, %arg1: i32) -> (i32, i32) {
    %c1_i32 = arith.constant 1 : i32
    %0 = arith.muli %arg0, %c1_i32 : i32
    %1 = arith.addi %0, %arg1 : i32
    %c0_i32 = arith.constant 0 : i32
    %c0_i32_0 = arith.constant 0 : i32
    return %1, %c0_i32 : i32, i32
  }
  func.func @transform_2(%arg0: i32, %arg1: i32) -> (i32, i32) {
    %c0_i32 = arith.constant 0 : i32
    %c0_i32_0 = arith.constant 0 : i32
    return %arg0, %c0_i32 : i32, i32
  }
}

</mosaic_0001>

<llo_original>
// kernel: tpu_custom_call.1
$region0: #{tpu_custom_call.1}
  #allocation0 [shape = 'u32[]', space=smem, size = 0x4, offset = 0x4, fixed_abs, tag = 'smem constant byte address 0x4 - core index']
  #allocation1 [shape = 'u32[72,128]{1,0:T(1,128)}', space=vmem, size = 0x9000, scoped, tag = 'internal scratch']
  #allocation2 [shape = 'f32[8,128]{1,0:T(8,128)}', space=vmem, size = 0x1000, scoped, tag = 'scratch operand']
  %s0 = inlined_call_operand.hbm [shape: f32[16,128], index: 0, kind: input, shape index: {}]
  %s1 = inlined_call_operand.hbm [shape: f32[16,128], index: 1, kind: input, shape index: {}]
  %s2 = inlined_call_operand.hbm [shape: f32[1,1], index: 2, kind: output, shape index: {}]
  %s3 = sld [smem:[#allocation0]]
  $region34: #{tpu_custom_call.1} parent=0
    _
  %s5 = ssub.s32 1, %s3
  %s6 = scalar_select 0, %s5, %s3
  $region1: #{tpu_custom_call.1} parent=0
    #allocation3 [shape = 'u8[8192]{0}', space=vmem, size = 0x2000, scoped, tag = 'input window, operand 0, single buffered']
    #allocation4 [shape = 's32[1]{0}', space=sflag, size = 0x4, scoped, tag = 'scoped memory for tpu_custom_call.1']
    #allocation5 [shape = 's32[1]{0}', space=sflag, size = 0x4, scoped, tag = 'scoped memory for tpu_custom_call.1']
    #allocation6 [shape = 'u8[8192]{0}', space=vmem, size = 0x2000, scoped, tag = 'input window, operand 1, single buffered']
    #allocation7 [shape = 's32[1]{0}', space=sflag, size = 0x4, scoped, tag = 'scoped memory for tpu_custom_call.1']
    #allocation8 [shape = 'u8[512]{0}', space=smem, size = 0x200, scoped, tag = 'output window, operand 0, single buffered']
    %7 = vsyncpa [#allocation4], 0
    %8 = vsyncpa [#allocation7], 0
    %9 = vsyncpa [#allocation5], 0
    // Predicated region
    $region2: #{tpu_custom_call.1} parent=1 // pred_check
      _
    $region3: #{tpu_custom_call.1} parent=1 // pred_check_branch
      %11 = sbr.rel (0) target = $region5
    $region4: #{tpu_custom_call.1} parent=1 // pred_region
      %s12 = sadd.s32 0, 0
      %s13 = smul.u32 2, %s12
      %15 = vsyncadd [#allocation4], 0
      %s16 = smul.addr %s13, 8
      %s17 = scalar_lea.hbm %s0, %s16
      %s18 = sshll.u32 %s17, 4
      %s19 = int_to_ptr.hbm [resolvable:$true] %s18
      %s20 = sshll.u32 [#allocation3], 4
      %s21 = int_to_ptr.vmem [resolvable:$true] %s20
      %26 = dma.hbm_to_vmem [thread:$0]  %s19, 256, %s21, [#allocation4], 128, 128, 8
    $region5: #{tpu_custom_call.1} parent=1 // pred_fallthru
      _
    // Predicated region
    $region6: #{tpu_custom_call.1} parent=1 // pred_check
      _
    $region7: #{tpu_custom_call.1} parent=1 // pred_check_branch
      %28 = sbr.rel (0) target = $region9
    $region8: #{tpu_custom_call.1} parent=1 // pred_region
      %s29 = sadd.s32 0, 0
      %s30 = smul.u32 2, %s29
      %32 = vsyncadd [#allocation7], 0
      %s33 = smul.addr %s30, 8
      %s34 = scalar_lea.hbm %s1, %s33
      %s35 = sshll.u32 %s34, 4
      %s36 = int_to_ptr.hbm [resolvable:$true] %s35
      %s37 = sshll.u32 [#allocation6], 4
      %s38 = int_to_ptr.vmem [resolvable:$true] %s37
      %43 = dma.hbm_to_vmem [thread:$0]  %s36, 256, %s38, [#allocation7], 128, 128, 8
    $region9: #{tpu_custom_call.1} parent=1 // pred_fallthru
      _
    // Predicated region
    $region10: #{tpu_custom_call.1} parent=1 // pred_check
      _
    $region11: #{tpu_custom_call.1} parent=1 // pred_check_branch
      %45 = sbr.rel (0) target = $region13
    $region12: #{tpu_custom_call.1} parent=1 // pred_region
      %47 = dma.done [#allocation4], 256
    $region13: #{tpu_custom_call.1} parent=1 // pred_fallthru
      _
    // Predicated region
    $region14: #{tpu_custom_call.1} parent=1 // pred_check
      _
    $region15: #{tpu_custom_call.1} parent=1 // pred_check_branch
      %49 = sbr.rel (0) target = $region17
    $region16: #{tpu_custom_call.1} parent=1 // pred_region
      %51 = dma.done [#allocation7], 256
    $region17: #{tpu_custom_call.1} parent=1 // pred_fallthru
      _
    %s52 = sadd.s32 0, 0
    %s53 = smul.u32 2, %s52
    %s54 = sadd.s32 0, 0
    %s55 = smul.u32 2, %s54
    %p56 = scmp.eq.s32.totalorder 0, 0
    // Predicated region
    $region18: #{tpu_custom_call.1} parent=1 // pred_check
      %p57 = pneg %p56
    $region19: #{tpu_custom_call.1} parent=1 // pred_check_branch
      %59 = sbr.rel (%p57) target = $region21
    $region20: #{tpu_custom_call.1} parent=1 // pred_region
      %60 = vst [vmem:[#allocation2] sm:$0xff] 0.0
    $region21: #{tpu_custom_call.1} parent=1 // pred_fallthru
      _
    %v61 = vld [vmem:[#allocation3] sm:$0xff]
    %v62 = vld [vmem:[#allocation3 + $0x8] sm:$0xff]
    %v63 = vld [vmem:[#allocation6] sm:$0xff]
    %v64 = vld [vmem:[#allocation6 + $0x8] sm:$0xff]
    %v65 = vmax.f32 %v61, 0.0
    %v66 = vmax.f32 %v62, 0.0
    %v67 = vmul.f32 %v61, %v63
    %v68 = vmul.f32 %v62, %v64
    %v69 = vsub.f32 %v65, %v67
    %v70 = vsub.f32 %v66, %v68
    %v71 = vand.u32 2147483647, %v61
    %v72 = vand.u32 2147483647, %v62
    %v73 = vsub.f32 0.0, %v71
    %v74 = vsub.f32 0.0, %v72
    %v75 = vmul.f32 %v73, 1.442695
    %v76 = vpow.pop %v75
    %v77 = vmul.f32 %v74, 1.442695
    %v78 = vpow.pop %v77
    %v79 = vadd.f32 %v76, 1.0
    %v80 = vlog2.pop %v79
    %v81 = vmul.f32 %v80, 0.6931472
    %v82 = vmul.f32 -0.5, %v76
    %v83 = vadd.f32 %v82, 1.0
    %v84 = vmul.f32 %v83, %v76
    %v85 = vand.u32 2147483647, %v76
    %vm86 = vcmp.lt.f32.partialorder %v85, 0.0004427343
    %v87 = vsel %vm86, %v84, %v81
    %v88 = vadd.f32 %v78, 1.0
    %v89 = vlog2.pop %v88
    %v90 = vmul.f32 %v89, 0.6931472
    %v91 = vmul.f32 -0.5, %v78
    %v92 = vadd.f32 %v91, 1.0
    %v93 = vmul.f32 %v92, %v78
    %v94 = vand.u32 2147483647, %v78
    %vm95 = vcmp.lt.f32.partialorder %v94, 0.0004427343
    %v96 = vsel %vm95, %v93, %v90
    %v97 = vadd.f32 %v69, %v87
    %v98 = vadd.f32 %v70, %v96
    %v99 = vsub.f32 0.0, %v97
    %v100 = vsub.f32 0.0, %v98
    %v101 = vmul.f32 %v99, 1.442695
    %v102 = vpow.pop %v101
    %v103 = vmul.f32 %v100, 1.442695
    %v104 = vpow.pop %v103
    %v105 = vsub.f32 1.0, %v102
    %v106 = vsub.f32 1.0, %v104
    %v107 = vmul.f32 %v105, %v105
    %v108 = vmul.f32 %v106, %v106
    %v109 = vmul.f32 %v97, %v107
    %v110 = vmul.f32 %v98, %v108
    %v111 = vld [vmem:[#allocation2] sm:$0xff]
    %v112 = vadd.f32 %v109, %v110
    %v113 = vadd.f32 %v111, %v112
    %114 = vst [vmem:[#allocation2] sm:$0xff] %v113
    // Predicated region
    $region22: #{tpu_custom_call.1} parent=1 // pred_check
      %p115 = pneg %p56
    $region23: #{tpu_custom_call.1} parent=1 // pred_check_branch
      %117 = sbr.rel (%p115) target = $region25
    $region24: #{tpu_custom_call.1} parent=1 // pred_region
      %v118 = vld [vmem:[#allocation2] sm:$0xff]
      %119 = vadd.xlane.f32.xlu0 %v118
      %v120 = vpop.xlane.xlu0 %119
      %v121 = vrot.slane %v120, 4
      %v122 = vadd.f32 %v120, %v121
      %v123 = vrot.slane %v122, 2
      %v124 = vadd.f32 %v122, %v123
      %v125 = vrot.slane %v124, 1
      %v126 = vadd.f32 %v124, %v125
      %s127 = vtos %v126
      %s128 = scalar_lea.smem [#allocation8], 0
      %129 = sst [smem:[%s128]] %s127
    $region25: #{tpu_custom_call.1} parent=1 // pred_fallthru
      _
    // Predicated region
    $region26: #{tpu_custom_call.1} parent=1 // pred_check
      _
    $region27: #{tpu_custom_call.1} parent=1 // pred_check_branch
      %131 = sbr.rel (0) target = $region29
    $region28: #{tpu_custom_call.1} parent=1 // pred_region
      %133 = vsyncadd [#allocation5], 0
      %s135 = sshll.u32 %s2, 4
      %s136 = int_to_ptr.hbm [resolvable:$true] %s135
      %138 = dma.smem_to_hbm [#allocation8], 16, %s136, [#allocation5]
    $region29: #{tpu_custom_call.1} parent=1 // pred_fallthru
      _
    // Predicated region
    $region30: #{tpu_custom_call.1} parent=1 // pred_check
      _
    $region31: #{tpu_custom_call.1} parent=1 // pred_check_branch
      %140 = sbr.rel (0) target = $region33
    $region32: #{tpu_custom_call.1} parent=1 // pred_region
      %142 = dma.done [#allocation5], 16
    $region33: #{tpu_custom_call.1} parent=1 // pred_fallthru
      _
    %143 = sfence
    %144 = vsyncpa [#allocation4], 1
    %145 = vsyncpa [#allocation7], 1
    %146 = vsyncpa [#allocation5], 1

</llo_original>
